<compile_context>
chip_gen: v7x
topology: tpu7x:2x2x1
jax: 0.10.0
libtpu: 0.0.40
codegen_flags: <defaults>
</compile_context>

<pallas_src>
import functools

import jax
import jax.numpy as jnp
from jax import lax
from jax.experimental import pallas as pl
from jax.experimental.pallas import tpu as pltpu


def _round_up(v, m):
    return -(-v // m) * m


def _causal_conv_kernel(x_ref, w_ref, b_ref, o_ref, xw_ref, *, taps, dilation,
                        compute_dtype):
    """One grid step: `bt` batch elements of the causal dilated convolution.

    x_ref : (bt, Cin, L)      original dtype (no wrapper cast); sequence on lanes
    w_ref : (taps*Cout, Cin)  compute dtype; tap j occupies rows [j*Cout, (j+1)*Cout)
    b_ref : (Cout, 1)         f32 bias column
    o_ref : (bt, Cout, T)     output block, T = L + dilation*(taps-2)
    xw_ref: (Cin, Tx)         staging scratch, Tx = round_up(max(L, T), 128)
    """
    bt, cin, xlen = x_ref.shape
    cout, out_len = o_ref.shape[1], o_ref.shape[2]
    cdt = jnp.dtype(compute_dtype)
    tx = xw_ref.shape[1]                    # 128-aligned compute width
    need_stage = tx != xlen                 # k > 2 and/or lane-unaligned L

    w = w_ref[...]                          # VMEM-resident weights, loaded once per step
    bias = b_ref[...]                       # (Cout, 1) f32

    # Per-tap causal shifts and boundary masks, hoisted out of the batch loop
    # (the zero-shift tap j = taps-1 needs no mask).
    lane = lax.broadcasted_iota(jnp.int32, (cout, tx), 1)
    shifts = [dilation * (taps - 1 - j) for j in range(taps - 1)]
    masks = [lane >= off for off in shifts]

    if need_stage:
        # Zero once per grid step; lanes >= L stay zero (the right causal zero padding).
        xw_ref[...] = jnp.zeros((cin, tx), cdt)

    def one_batch(b, carry):
        if need_stage:
            xw_ref[:, :xlen] = x_ref[b].astype(cdt)        # cast + widen in VMEM
            x = xw_ref[...]                                # (Cin, Tx)
        else:
            x = x_ref[b]                                   # (Cin, Tx), Tx == L
            if x.dtype != cdt:
                x = x.astype(cdt)                          # in-register cast, no HBM pass
        # One MXU matmul covering all taps: (taps*Cout, Cin) @ (Cin, Tx) -> f32.
        z = jnp.dot(w, x, preferred_element_type=jnp.float32)
        # Seed the accumulator with the zero-shift tap plus the bias (no zeros pass).
        acc = z[(taps - 1) * cout:, :] + bias
        for j in range(taps - 1):                          # static, tiny unroll over taps
            off = shifts[j]
            # out[:, t] += z_j[:, t - off]; lanes t < off are the left zero padding, so
            # the roll wraparound is fully masked.
            shifted = pltpu.roll(z[j * cout:(j + 1) * cout, :], off, axis=1)
            acc = acc + jnp.where(masks[j], shifted, 0.0)
        y = acc if out_len == tx else acc[:, :out_len]     # only when out_len unaligned
        o_ref[b] = y.astype(o_ref.dtype)
        return carry

    lax.fori_loop(0, bt, one_batch, 0, unroll=(True if bt <= 8 else 2))


def casual_conv1d(x, weight, bias=None, *, stride=1, dilation=1, groups=1,
                  batch_tile=None, compute_dtype=jnp.bfloat16, out_dtype=None,
                  tile_budget_bytes=12 * 1024 * 1024):
    """Pallas forward of CasualConv1d. x: (N, Cin, L) NCW; weight: (Cout, Cin, K)."""
    # TODO(synk): stride != 1 and groups != 1 (unused by the SNAIL module, which keeps the
    # Conv1d defaults) are not implemented in the Pallas kernel.
    if stride != 1 or groups != 1:
        raise NotImplementedError("Pallas CasualConv1d supports stride=1, groups=1 only.")
    n, cin, length = x.shape
    cout, cin_w, k = weight.shape
    assert cin_w == cin, (cin_w, cin)
    d = int(dilation)
    out_len = length + d * (k - 2)          # PyTorch: (L + 2p - d(k-1)) - d with p = d(k-1)
    assert out_len > 0, "output length must be positive"
    out_dtype = x.dtype if out_dtype is None else jnp.dtype(out_dtype)
    tx = _round_up(max(length, out_len), 128)   # lane-aligned in-kernel compute width

    # --- Batch tile from a VMEM budget (double-buffered input + output per grid step).
    # ~12 MiB keeps the kernel comfortably inside v7x's 64 MiB VMEM (32 MiB scoped
    # default raised below); v5e / v6e have 128 MiB of headroom.
    per_elem = (cin * length * jnp.dtype(x.dtype).itemsize
                + cout * out_len * jnp.dtype(out_dtype).itemsize)
    bt_cap = max(1, min(n, int(tile_budget_bytes) // max(1, 2 * per_elem)))
    if batch_tile is not None:
        bt_cap = max(1, min(bt_cap, int(batch_tile)))
    # Prefer a divisor of N (avoids an HBM batch-padding pass) unless it is much smaller.
    bt_div = next((c for c in range(bt_cap, 0, -1) if n % c == 0), 1)
    bt = bt_div if 2 * bt_div >= bt_cap else bt_cap
    n_pad = _round_up(n, bt)
    steps = n_pad // bt
    if n_pad != n and steps > 1 and steps % 2 == 1:
        n_pad += bt                         # even step count splits evenly over 2 TCs (v7x)
    x_in = x if n_pad == n else jnp.pad(x, ((0, n_pad - n), (0, 0), (0, 0)))

    # Tiny, VMEM-resident operands: (Cout, Cin, K) -> (K*Cout, Cin) in the MXU dtype
    # (tap j in rows [j*Cout, (j+1)*Cout)); bias as an f32 column.
    w_all = jnp.transpose(weight, (2, 0, 1)).reshape(k * cout, cin).astype(compute_dtype)
    b_col = (jnp.zeros((cout, 1), jnp.float32) if bias is None
             else bias.astype(jnp.float32).reshape(cout, 1))

    kernel = functools.partial(_causal_conv_kernel, taps=k, dilation=d,
                               compute_dtype=compute_dtype)
    out = pl.pallas_call(
        kernel,
        out_shape=jax.ShapeDtypeStruct((n_pad, cout, out_len), out_dtype),
        grid=(n_pad // bt,),
        in_specs=[
            pl.BlockSpec((bt, cin, length), lambda i: (i, 0, 0)),   # x in original dtype
            pl.BlockSpec((k * cout, cin), lambda i: (0, 0)),        # resident weights
            pl.BlockSpec((cout, 1), lambda i: (0, 0)),              # resident bias
        ],
        out_specs=pl.BlockSpec((bt, cout, out_len), lambda i: (i, 0, 0)),
        scratch_shapes=[pltpu.VMEM((cin, tx), compute_dtype)],      # input staging buffer
        compiler_params=pltpu.CompilerParams(
            dimension_semantics=("parallel",),
            vmem_limit_bytes=48 * 1024 * 1024),
    )(x_in, w_all, b_col)
    return out[:n] if n_pad != n else out


def casual_conv1d_reference(x, weight, bias=None, *, dilation=1, compute_dtype=jnp.float32):
    """Pure-JAX (lax.conv) reference of the PyTorch CasualConv1d forward."""
    k = weight.shape[-1]
    pad = dilation * (k - 1)
    y = lax.conv_general_dilated(
        x.astype(compute_dtype), weight.astype(compute_dtype),
        window_strides=(1,), padding=((pad, pad),), rhs_dilation=(dilation,),
        dimension_numbers=("NCH", "OIH", "NCH"),
        preferred_element_type=jnp.float32)
    if bias is not None:
        y = y + bias.astype(jnp.float32)[None, :, None]
    return y[:, :, :-dilation]


if __name__ == "__main__":
    key = jax.random.PRNGKey(0)
    configs = [
        # SNAIL configuration: kernel_size=2, lane-aligned L -> clean lane-dense path.
        dict(n=4, cin=16, cout=32, k=2, dilation=2, length=128, batch_tile=None,
             out_dtype=None),
        # k>2 + non-divisible batch: exercises batch padding, the staged (aligned) compute
        # width and masked output stores (out_len = 66).
        dict(n=5, cin=8, cout=16, k=3, dilation=2, length=64, batch_tile=4,
             out_dtype=None),
        # bf16 output writeback (halves output HBM bytes when the caller allows it).
        dict(n=4, cin=16, cout=32, k=2, dilation=4, length=128, batch_tile=None,
             out_dtype=jnp.bfloat16),
    ]
    for cfg in configs:
        key, kx, kw, kb = jax.random.split(key, 4)
        x = jax.random.normal(kx, (cfg["n"], cfg["cin"], cfg["length"]), jnp.float32)
        w = jax.random.normal(kw, (cfg["cout"], cfg["cin"], cfg["k"]), jnp.float32)
        w = w / jnp.sqrt(cfg["cin"] * cfg["k"])
        b = 0.1 * jax.random.normal(kb, (cfg["cout"],), jnp.float32)

        out = jax.block_until_ready(
            casual_conv1d(x, w, b, dilation=cfg["dilation"],
                          batch_tile=cfg["batch_tile"], out_dtype=cfg["out_dtype"]))

        t_out = cfg["length"] + cfg["dilation"] * (cfg["k"] - 2)
        assert out.shape == (cfg["n"], cfg["cout"], t_out), out.shape
        want_dtype = jnp.float32 if cfg["out_dtype"] is None else cfg["out_dtype"]
        assert out.dtype == want_dtype, out.dtype

        # Tight check vs a reference with identical bf16 operand rounding (both sides
        # accumulate in f32): only accumulation-order / output-rounding noise remains.
        ref_bf16 = jax.block_until_ready(
            casual_conv1d_reference(x, w, b, dilation=cfg["dilation"],
                                    compute_dtype=jnp.bfloat16))
        tol = 1e-3 if want_dtype == jnp.float32 else 3e-2
        err = float(jnp.max(jnp.abs(out.astype(jnp.float32) - ref_bf16)))
        assert err < tol, (err, tol)

        # Loose sanity check vs the full-f32 PyTorch-equivalent forward (bf16 MXU operands
        # introduce ~1e-2 absolute noise at these magnitudes).
        ref_f32 = jax.block_until_ready(
            casual_conv1d_reference(x, w, b, dilation=cfg["dilation"],
                                    compute_dtype=jnp.float32))
        err32 = float(jnp.max(jnp.abs(out.astype(jnp.float32) - ref_f32)))
        tol32 = 5e-2 if want_dtype == jnp.float32 else 7e-2
        assert err32 < tol32, (err32, tol32)

    print("KERNEL_OK")
</pallas_src>

<mosaic_0001>
module attributes {stable_mosaic.version = 11 : i64} {
  func.func @_causal_conv_kernel(%arg0: i32, %arg1: memref<4x16x128xf32, #tpu.memory_space<vmem>>, %arg2: memref<64x16xbf16, #tpu.memory_space<vmem>>, %arg3: memref<32x1xf32, #tpu.memory_space<vmem>>, %arg4: memref<4x32x128xf32, #tpu.memory_space<vmem>>, %arg5: memref<16x128xbf16, #tpu.memory_space<vmem>>) attributes {dimension_semantics = [#tpu.dimension_semantics<parallel>], iteration_bounds = array<i64: 1>, scalar_prefetch = 0 : i64, scratch_operands = 1 : i64, tpu.core_type = #tpu.core_type<tc>, window_params = [{transform_indices = @transform_0, window_bounds = array<i64: 4, 16, 128>}, {pipeline_mode = #tpu.pipeline_mode<synchronous>, transform_indices = @transform_1, window_bounds = array<i64: 64, 16>}, {pipeline_mode = #tpu.pipeline_mode<synchronous>, transform_indices = @transform_2, window_bounds = array<i64: 32, 1>}, {transform_indices = @transform_3, window_bounds = array<i64: 4, 32, 128>}]} {
    %c0 = arith.constant 0 : index
    %c0_0 = arith.constant 0 : index
    %0 = vector.load %arg2[%c0, %c0_0] : memref<64x16xbf16, #tpu.memory_space<vmem>>, vector<64x16xbf16>
    %c0_1 = arith.constant 0 : index
    %c0_2 = arith.constant 0 : index
    %1 = vector.load %arg3[%c0_1, %c0_2] : memref<32x1xf32, #tpu.memory_space<vmem>>, vector<32x1xf32>
    %2 = tpu.iota {dimensions = array<i32: 1>} : vector<32x128xi32>
    %c2_i32 = arith.constant 2 : i32
    %3 = vector.broadcast %c2_i32 : i32 to vector<32x128xi32>
    %4 = arith.cmpi sge, %2, %3 : vector<32x128xi32>
    %c0_i32 = arith.constant 0 : i32
    %5 = arith.index_cast %c0_i32 : i32 to index
    %c0_3 = arith.constant 0 : index
    %c0_4 = arith.constant 0 : index
    %6 = vector.load %arg1[%5, %c0_3, %c0_4] : memref<4x16x128xf32, #tpu.memory_space<vmem>>, vector<1x16x128xf32>
    %7 = vector.shape_cast %6 : vector<1x16x128xf32> to vector<16x128xf32>
    %8 = arith.truncf %7 : vector<16x128xf32> to vector<16x128xbf16>
    %cst = arith.constant dense<0.000000e+00> : vector<64x128xf32>
    %9 = tpu.matmul %0, %8, %cst {dimension_numbers = #tpu.dot_dimension_numbers<[1], [0], [0], [1], [0, 0, 1, 1], [], []>} : vector<64x16xbf16>, vector<16x128xbf16>, vector<64x128xf32> -> vector<64x128xf32>
    %10 = vector.extract_strided_slice %9 {offsets = [32, 0], sizes = [32, 128], strides = [1, 1]} : vector<64x128xf32> to vector<32x128xf32>
    %11 = vector.broadcast %1 : vector<32x1xf32> to vector<32x128xf32>
    %12 = arith.addf %10, %11 : vector<32x128xf32>
    %13 = vector.extract_strided_slice %9 {offsets = [0, 0], sizes = [32, 128], strides = [1, 1]} : vector<64x128xf32> to vector<32x128xf32>
    %c2_i32_5 = arith.constant 2 : i32
    %14 = tpu.dynamic_rotate %13 by %c2_i32_5 dim 1 : vector<32x128xf32>, i32 -> vector<32x128xf32>
    %cst_6 = arith.constant 0.000000e+00 : f32
    %15 = vector.broadcast %cst_6 : f32 to vector<32x128xf32>
    %16 = arith.select %4, %14, %15 : vector<32x128xi1>, vector<32x128xf32>
    %17 = arith.addf %12, %16 : vector<32x128xf32>
    %18 = arith.index_cast %c0_i32 : i32 to index
    %c0_7 = arith.constant 0 : index
    %c0_8 = arith.constant 0 : index
    %19 = vector.load %arg4[%18, %c0_7, %c0_8] : memref<4x32x128xf32, #tpu.memory_space<vmem>>, vector<1x32x128xf32>
    %20 = vector.shape_cast %19 : vector<1x32x128xf32> to vector<32x128xf32>
    %21 = vector.shape_cast %17 : vector<32x128xf32> to vector<1x32x128xf32>
    tpu.vector_store %arg4[%18, %c0_7, %c0_8], %21 {strides = array<i32>} : memref<4x32x128xf32, #tpu.memory_space<vmem>>, vector<1x32x128xf32>,
    %c1_i32 = arith.constant 1 : i32
    %22 = arith.index_cast %c1_i32 : i32 to index
    %c0_9 = arith.constant 0 : index
    %c0_10 = arith.constant 0 : index
    %23 = vector.load %arg1[%22, %c0_9, %c0_10] : memref<4x16x128xf32, #tpu.memory_space<vmem>>, vector<1x16x128xf32>
    %24 = vector.shape_cast %23 : vector<1x16x128xf32> to vector<16x128xf32>
    %25 = arith.truncf %24 : vector<16x128xf32> to vector<16x128xbf16>
    %cst_11 = arith.constant dense<0.000000e+00> : vector<64x128xf32>
    %26 = tpu.matmul %0, %25, %cst_11 {dimension_numbers = #tpu.dot_dimension_numbers<[1], [0], [0], [1], [0, 0, 1, 1], [], []>} : vector<64x16xbf16>, vector<16x128xbf16>, vector<64x128xf32> -> vector<64x128xf32>
    %27 = vector.extract_strided_slice %26 {offsets = [32, 0], sizes = [32, 128], strides = [1, 1]} : vector<64x128xf32> to vector<32x128xf32>
    %28 = vector.broadcast %1 : vector<32x1xf32> to vector<32x128xf32>
    %29 = arith.addf %27, %28 : vector<32x128xf32>
    %30 = vector.extract_strided_slice %26 {offsets = [0, 0], sizes = [32, 128], strides = [1, 1]} : vector<64x128xf32> to vector<32x128xf32>
    %c2_i32_12 = arith.constant 2 : i32
    %31 = tpu.dynamic_rotate %30 by %c2_i32_12 dim 1 : vector<32x128xf32>, i32 -> vector<32x128xf32>
    %cst_13 = arith.constant 0.000000e+00 : f32
    %32 = vector.broadcast %cst_13 : f32 to vector<32x128xf32>
    %33 = arith.select %4, %31, %32 : vector<32x128xi1>, vector<32x128xf32>
    %34 = arith.addf %29, %33 : vector<32x128xf32>
    %35 = arith.index_cast %c1_i32 : i32 to index
    %c0_14 = arith.constant 0 : index
    %c0_15 = arith.constant 0 : index
    %36 = vector.load %arg4[%35, %c0_14, %c0_15] : memref<4x32x128xf32, #tpu.memory_space<vmem>>, vector<1x32x128xf32>
    %37 = vector.shape_cast %36 : vector<1x32x128xf32> to vector<32x128xf32>
    %38 = vector.shape_cast %34 : vector<32x128xf32> to vector<1x32x128xf32>
    tpu.vector_store %arg4[%35, %c0_14, %c0_15], %38 {strides = array<i32>} : memref<4x32x128xf32, #tpu.memory_space<vmem>>, vector<1x32x128xf32>,
    %c2_i32_16 = arith.constant 2 : i32
    %39 = arith.index_cast %c2_i32_16 : i32 to index
    %c0_17 = arith.constant 0 : index
    %c0_18 = arith.constant 0 : index
    %40 = vector.load %arg1[%39, %c0_17, %c0_18] : memref<4x16x128xf32, #tpu.memory_space<vmem>>, vector<1x16x128xf32>
    %41 = vector.shape_cast %40 : vector<1x16x128xf32> to vector<16x128xf32>
    %42 = arith.truncf %41 : vector<16x128xf32> to vector<16x128xbf16>
    %cst_19 = arith.constant dense<0.000000e+00> : vector<64x128xf32>
    %43 = tpu.matmul %0, %42, %cst_19 {dimension_numbers = #tpu.dot_dimension_numbers<[1], [0], [0], [1], [0, 0, 1, 1], [], []>} : vector<64x16xbf16>, vector<16x128xbf16>, vector<64x128xf32> -> vector<64x128xf32>
    %44 = vector.extract_strided_slice %43 {offsets = [32, 0], sizes = [32, 128], strides = [1, 1]} : vector<64x128xf32> to vector<32x128xf32>
    %45 = vector.broadcast %1 : vector<32x1xf32> to vector<32x128xf32>
    %46 = arith.addf %44, %45 : vector<32x128xf32>
    %47 = vector.extract_strided_slice %43 {offsets = [0, 0], sizes = [32, 128], strides = [1, 1]} : vector<64x128xf32> to vector<32x128xf32>
    %c2_i32_20 = arith.constant 2 : i32
    %48 = tpu.dynamic_rotate %47 by %c2_i32_20 dim 1 : vector<32x128xf32>, i32 -> vector<32x128xf32>
    %cst_21 = arith.constant 0.000000e+00 : f32
    %49 = vector.broadcast %cst_21 : f32 to vector<32x128xf32>
    %50 = arith.select %4, %48, %49 : vector<32x128xi1>, vector<32x128xf32>
    %51 = arith.addf %46, %50 : vector<32x128xf32>
    %52 = arith.index_cast %c2_i32_16 : i32 to index
    %c0_22 = arith.constant 0 : index
    %c0_23 = arith.constant 0 : index
    %53 = vector.load %arg4[%52, %c0_22, %c0_23] : memref<4x32x128xf32, #tpu.memory_space<vmem>>, vector<1x32x128xf32>
    %54 = vector.shape_cast %53 : vector<1x32x128xf32> to vector<32x128xf32>
    %55 = vector.shape_cast %51 : vector<32x128xf32> to vector<1x32x128xf32>
    tpu.vector_store %arg4[%52, %c0_22, %c0_23], %55 {strides = array<i32>} : memref<4x32x128xf32, #tpu.memory_space<vmem>>, vector<1x32x128xf32>,
    %c3_i32 = arith.constant 3 : i32
    %56 = arith.index_cast %c3_i32 : i32 to index
    %c0_24 = arith.constant 0 : index
    %c0_25 = arith.constant 0 : index
    %57 = vector.load %arg1[%56, %c0_24, %c0_25] : memref<4x16x128xf32, #tpu.memory_space<vmem>>, vector<1x16x128xf32>
    %58 = vector.shape_cast %57 : vector<1x16x128xf32> to vector<16x128xf32>
    %59 = arith.truncf %58 : vector<16x128xf32> to vector<16x128xbf16>
    %cst_26 = arith.constant dense<0.000000e+00> : vector<64x128xf32>
    %60 = tpu.matmul %0, %59, %cst_26 {dimension_numbers = #tpu.dot_dimension_numbers<[1], [0], [0], [1], [0, 0, 1, 1], [], []>} : vector<64x16xbf16>, vector<16x128xbf16>, vector<64x128xf32> -> vector<64x128xf32>
    %61 = vector.extract_strided_slice %60 {offsets = [32, 0], sizes = [32, 128], strides = [1, 1]} : vector<64x128xf32> to vector<32x128xf32>
    %62 = vector.broadcast %1 : vector<32x1xf32> to vector<32x128xf32>
    %63 = arith.addf %61, %62 : vector<32x128xf32>
    %64 = vector.extract_strided_slice %60 {offsets = [0, 0], sizes = [32, 128], strides = [1, 1]} : vector<64x128xf32> to vector<32x128xf32>
    %c2_i32_27 = arith.constant 2 : i32
    %65 = tpu.dynamic_rotate %64 by %c2_i32_27 dim 1 : vector<32x128xf32>, i32 -> vector<32x128xf32>
    %cst_28 = arith.constant 0.000000e+00 : f32
    %66 = vector.broadcast %cst_28 : f32 to vector<32x128xf32>
    %67 = arith.select %4, %65, %66 : vector<32x128xi1>, vector<32x128xf32>
    %68 = arith.addf %63, %67 : vector<32x128xf32>
    %69 = arith.index_cast %c3_i32 : i32 to index
    %c0_29 = arith.constant 0 : index
    %c0_30 = arith.constant 0 : index
    %70 = vector.load %arg4[%69, %c0_29, %c0_30] : memref<4x32x128xf32, #tpu.memory_space<vmem>>, vector<1x32x128xf32>
    %71 = vector.shape_cast %70 : vector<1x32x128xf32> to vector<32x128xf32>
    %72 = vector.shape_cast %68 : vector<32x128xf32> to vector<1x32x128xf32>
    tpu.vector_store %arg4[%69, %c0_29, %c0_30], %72 {strides = array<i32>} : memref<4x32x128xf32, #tpu.memory_space<vmem>>, vector<1x32x128xf32>,
    %c4_i32 = arith.constant 4 : i32
    return
  }
  func.func @transform_0(%arg0: i32) -> (i32, i32, i32) {
    %c0_i32 = arith.constant 0 : i32
    %c0_i32_0 = arith.constant 0 : i32
    %c0_i32_1 = arith.constant 0 : i32
    return %arg0, %c0_i32, %c0_i32_0 : i32, i32, i32
  }
  func.func @transform_1(%arg0: i32) -> (i32, i32) {
    %c0_i32 = arith.constant 0 : i32
    %c0_i32_0 = arith.constant 0 : i32
    %c0_i32_1 = arith.constant 0 : i32
    return %c0_i32, %c0_i32_0 : i32, i32
  }
  func.func @transform_2(%arg0: i32) -> (i32, i32) {
    %c0_i32 = arith.constant 0 : i32
    %c0_i32_0 = arith.constant 0 : i32
    %c0_i32_1 = arith.constant 0 : i32
    return %c0_i32, %c0_i32_0 : i32, i32
  }
  func.func @transform_3(%arg0: i32) -> (i32, i32, i32) {
    %c0_i32 = arith.constant 0 : i32
    %c0_i32_0 = arith.constant 0 : i32
    %c0_i32_1 = arith.constant 0 : i32
    return %arg0, %c0_i32, %c0_i32_0 : i32, i32, i32
  }
}

</mosaic_0001>

<llo_original>
// kernel: tpu_custom_call.1
$region0: #{tpu_custom_call.1}
  #allocation0 [shape = 'u32[]', space=smem, size = 0x4, offset = 0x4, fixed_abs, tag = 'smem constant byte address 0x4 - core index']
  #allocation1 [shape = 'u32[144,128]{1,0:T(1,128)}', space=vmem, size = 0x12000, scoped, tag = 'internal scratch']
  #allocation2 [shape = 'bf16[16,128]{1,0:T(16,128)(2,1)}', space=vmem, size = 0x1000, scoped, tag = 'scratch operand']
  %s0 = inlined_call_operand.vmem [shape: f32[4,16,128], index: 0, kind: input, shape index: {}]
  %s1 = inlined_call_operand.vmem [shape: bf16[64,16], index: 1, kind: input, shape index: {}]
  %s2 = inlined_call_operand.vmem [shape: f32[32,1], index: 2, kind: input, shape index: {}]
  %s3 = inlined_call_operand.hbm [shape: f32[4,32,128], index: 3, kind: output, shape index: {}]
  %s4 = sld [smem:[#allocation0]]
  $region22: #{tpu_custom_call.1} parent=0
    _
  %s6 = ssub.s32 1, %s4
  %s7 = scalar_select 0, %s6, %s4
  $region1: #{tpu_custom_call.1} parent=0
    #allocation3 [shape = 'u8[65536]{0}', space=vmem, size = 0x10000, scoped, tag = 'output window, operand 0, single buffered']
    #allocation4 [shape = 's32[1]{0}', space=sflag, size = 0x4, scoped, tag = 'scoped memory for tpu_custom_call.1']
    %8 = vsyncpa [#allocation4], 0
    // Predicated region
    $region2: #{tpu_custom_call.1} parent=1 // pred_check
      _
    $region3: #{tpu_custom_call.1} parent=1 // pred_check_branch
      %10 = sbr.rel (0) target = $region5
    $region4: #{tpu_custom_call.1} parent=1 // pred_region
      _
    $region5: #{tpu_custom_call.1} parent=1 // pred_fallthru
      _
    // Predicated region
    $region6: #{tpu_custom_call.1} parent=1 // pred_check
      _
    $region7: #{tpu_custom_call.1} parent=1 // pred_check_branch
      %12 = sbr.rel (0) target = $region9
    $region8: #{tpu_custom_call.1} parent=1 // pred_region
      _
    $region9: #{tpu_custom_call.1} parent=1 // pred_fallthru
      _
    // Predicated region
    $region10: #{tpu_custom_call.1} parent=1 // pred_check
      _
    $region11: #{tpu_custom_call.1} parent=1 // pred_check_branch
      %14 = sbr.rel (0) target = $region13
    $region12: #{tpu_custom_call.1} parent=1 // pred_region
      _
    $region13: #{tpu_custom_call.1} parent=1 // pred_fallthru
      _
    %v16 = vld [vmem:[%s1] sm:$0xf]
    %v17 = vld [vmem:[%s1 + $0x4] sm:$0xf]
    %v18 = vld [vmem:[%s1 + $0x8] sm:$0xf]
    %v19 = vld [vmem:[%s1 + $0xc] sm:$0xf]
    %v20 = vld [vmem:[%s1 + $0x10] sm:$0xf]
    %v21 = vld [vmem:[%s1 + $0x14] sm:$0xf]
    %v22 = vld [vmem:[%s1 + $0x18] sm:$0xf]
    %v23 = vld [vmem:[%s1 + $0x1c] sm:$0xf]
    %v24 = vld [vmem:[%s2] sm:$0xff]
    %v25 = vld [vmem:[%s2 + $0x8] sm:$0xff]
    %v26 = vld [vmem:[%s2 + $0x10] sm:$0xff]
    %v27 = vld [vmem:[%s2 + $0x18] sm:$0xff]
    %v28 = vlaneseq
    %v29 = vand.u32 %v28, 127
    %vm30 = vcmp.ge.s32.totalorder %v29, 2
    %v31 = vld [vmem:[%s0] sm:$0xff]
    %v32 = vld [vmem:[%s0 + $0x8] sm:$0xff]
    %v33 = vpack.c.bf16 %v32, %v31
    %v42 = vunpack.c.l.b16 %v16
    %v43 = vunpack.c.l.b16 %v17
    %v44 = vunpack.c.l.b16 %v18
    %v45 = vunpack.c.l.b16 %v19
    %v46 = vunpack.c.l.b16 %v20
    %v47 = vunpack.c.l.b16 %v21
    %v48 = vunpack.c.l.b16 %v22
    %v49 = vunpack.c.l.b16 %v23
    %v50 = vpack.c.b16 %v43, %v42
    %v51 = vpack.c.b16 %v45, %v44
    %v52 = vpack.c.b16 %v47, %v46
    %v53 = vpack.c.b16 %v49, %v48
    %vm54 = vcmask 130048
    %v56 = vsel %vm54, %v50, 0
    %v59 = vsel %vm54, %v51, 0
    %v62 = vsel %vm54, %v52, 0
    %v65 = vsel %vm54, %v53, 0
    %67 = vmatprep.subr.bf16.mxu0 0
    %68 = vmatpush1.bf16.msra.mxu0 %v33
    %69 = vmatprep.subr.bf16.mxu0 0
    %70 = vmatpush1.bf16.msra.mxu0 0
    %71 = vmatprep.subr.bf16.mxu0 0
    %72 = vmatpush1.bf16.msra.mxu0 0
    %73 = vmatprep.subr.bf16.mxu0 0
    %74 = vmatpush1.bf16.msra.mxu0 0
    %75 = vmatprep.subr.bf16.mxu0 0
    %76 = vmatpush1.bf16.msra.mxu0 0
    %77 = vmatprep.subr.bf16.mxu0 0
    %78 = vmatpush1.bf16.msra.mxu0 0
    %79 = vmatprep.subr.bf16.mxu0 0
    %80 = vmatpush1.bf16.msra.mxu0 0
    %81 = vmatprep.subr.bf16.mxu0 0
    %82 = vmatpush1.bf16.msra.mxu0 0
    %83 = vmatprep.subr.bf16.mxu0 0
    %84 = vmatpush1.bf16.msra.mxu0 0
    %85 = vmatprep.subr.bf16.mxu0 0
    %86 = vmatpush1.bf16.msra.mxu0 0
    %87 = vmatprep.subr.bf16.mxu0 0
    %88 = vmatpush1.bf16.msra.mxu0 0
    %89 = vmatprep.subr.bf16.mxu0 0
    %90 = vmatpush1.bf16.msra.mxu0 0
    %91 = vmatprep.subr.bf16.mxu0 0
    %92 = vmatpush1.bf16.msra.mxu0 0
    %93 = vmatprep.subr.bf16.mxu0 0
    %94 = vmatpush1.bf16.msra.mxu0 0
    %95 = vmatprep.subr.bf16.mxu0 0
    %96 = vmatpush1.bf16.msra.mxu0 0
    %97 = vmatprep.subr.bf16.mxu0 0
    %98 = vmatpush1.bf16.msra.mxu0 0
    %99 = vmatprep.mubr.bf16.mxu0 0
    %100 = vmatmul.mubr.bf16.gmra.mrb[0].mxu0 %v56
    %v101 = vpop.f32.mrb[0].mxu0
    %v102 = vadd.f32 0.0, %v101
    %v103 = vpop.f32.mrb[0].mxu0
    %v104 = vpop.f32.mrb[0].mxu0
    %v105 = vadd.f32 0.0, %v104
    %v106 = vpop.f32.mrb[0].mxu0
    %107 = vmatprep.mubr.bf16.mxu0 0
    %108 = vmatmul.mubr.bf16.gmra.mrb[0].mxu0 %v59
    %v109 = vpop.f32.mrb[0].mxu0
    %v110 = vadd.f32 0.0, %v109
    %v111 = vpop.f32.mrb[0].mxu0
    %v112 = vpop.f32.mrb[0].mxu0
    %v113 = vadd.f32 0.0, %v112
    %v114 = vpop.f32.mrb[0].mxu0
    %115 = vmatprep.mubr.bf16.mxu0 0
    %116 = vmatmul.mubr.bf16.gmra.mrb[0].mxu0 %v62
    %v117 = vpop.f32.mrb[0].mxu0
    %v118 = vadd.f32 0.0, %v117
    %v119 = vpop.f32.mrb[0].mxu0
    %v120 = vpop.f32.mrb[0].mxu0
    %v121 = vadd.f32 0.0, %v120
    %v122 = vpop.f32.mrb[0].mxu0
    %123 = vmatprep.mubr.bf16.mxu0 0
    %124 = vmatmul.mubr.bf16.gmra.mrb[0].mxu0 %v65
    %v125 = vpop.f32.mrb[0].mxu0
    %v126 = vadd.f32 0.0, %v125
    %v127 = vpop.f32.mrb[0].mxu0
    %v128 = vpop.f32.mrb[0].mxu0
    %v129 = vadd.f32 0.0, %v128
    %v130 = vpop.f32.mrb[0].mxu0
    %131 = vdwg.mxu0
    %133 = vset.pattern.permute.xlu0 0
    %134 = vperm.xlu0 %133, %v24
    %v135 = vpop.permute.xlu0 %134
    %138 = vset.pattern.permute.xlu0 0
    %139 = vperm.xlu0 %138, %v25
    %v140 = vpop.permute.xlu0 %139
    %143 = vset.pattern.permute.xlu0 0
    %144 = vperm.xlu0 %143, %v26
    %v145 = vpop.permute.xlu0 %144
    %148 = vset.pattern.permute.xlu0 0
    %149 = vperm.xlu0 %148, %v27
    %v150 = vpop.permute.xlu0 %149
    %v152 = vadd.f32 %v118, %v135
    %v153 = vadd.f32 %v121, %v140
    %v154 = vadd.f32 %v126, %v145
    %v155 = vadd.f32 %v129, %v150
    %156 = vrot.lane.b32.xlu0 %v102, 2
    %v157 = vpop.permute.xlu0 %156
    %158 = vrot.lane.b32.xlu0 %v105, 2
    %v159 = vpop.permute.xlu0 %158
    %160 = vrot.lane.b32.xlu0 %v110, 2
    %v161 = vpop.permute.xlu0 %160
    %162 = vrot.lane.b32.xlu0 %v113, 2
    %v163 = vpop.permute.xlu0 %162
    %v164 = vsel %vm30, %v157, 0.0
    %v165 = vsel %vm30, %v159, 0.0
    %v166 = vsel %vm30, %v161, 0.0
    %v167 = vsel %vm30, %v163, 0.0
    %v168 = vadd.f32 %v152, %v164
    %v169 = vadd.f32 %v153, %v165
    %v170 = vadd.f32 %v154, %v166
    %v171 = vadd.f32 %v155, %v167
    %172 = vst [vmem:[#allocation3] sm:$0xff] %v168
    %173 = vst [vmem:[#allocation3 + $0x8] sm:$0xff] %v169
    %174 = vst [vmem:[#allocation3 + $0x10] sm:$0xff] %v170
    %175 = vst [vmem:[#allocation3 + $0x18] sm:$0xff] %v171
    %s176 = scalar_lea.vmem %s0, 16
    %v177 = vld [vmem:[%s176] sm:$0xff]
    %v178 = vld [vmem:[%s176 + $0x8] sm:$0xff]
    %v179 = vpack.c.bf16 %v178, %v177
    %180 = vmatprep.subr.bf16.mxu0 0
    %181 = vmatpush1.bf16.msra.mxu0 %v179
    %182 = vmatprep.subr.bf16.mxu0 0
    %183 = vmatpush1.bf16.msra.mxu0 0
    %184 = vmatprep.subr.bf16.mxu0 0
    %185 = vmatpush1.bf16.msra.mxu0 0
    %186 = vmatprep.subr.bf16.mxu0 0
    %187 = vmatpush1.bf16.msra.mxu0 0
    %188 = vmatprep.subr.bf16.mxu0 0
    %189 = vmatpush1.bf16.msra.mxu0 0
    %190 = vmatprep.subr.bf16.mxu0 0
    %191 = vmatpush1.bf16.msra.mxu0 0
    %192 = vmatprep.subr.bf16.mxu0 0
    %193 = vmatpush1.bf16.msra.mxu0 0
    %194 = vmatprep.subr.bf16.mxu0 0
    %195 = vmatpush1.bf16.msra.mxu0 0
    %196 = vmatprep.subr.bf16.mxu0 0
    %197 = vmatpush1.bf16.msra.mxu0 0
    %198 = vmatprep.subr.bf16.mxu0 0
    %199 = vmatpush1.bf16.msra.mxu0 0
    %200 = vmatprep.subr.bf16.mxu0 0
    %201 = vmatpush1.bf16.msra.mxu0 0
    %202 = vmatprep.subr.bf16.mxu0 0
    %203 = vmatpush1.bf16.msra.mxu0 0
    %204 = vmatprep.subr.bf16.mxu0 0
    %205 = vmatpush1.bf16.msra.mxu0 0
    %206 = vmatprep.subr.bf16.mxu0 0
    %207 = vmatpush1.bf16.msra.mxu0 0
    %208 = vmatprep.subr.bf16.mxu0 0
    %209 = vmatpush1.bf16.msra.mxu0 0
    %210 = vmatprep.subr.bf16.mxu0 0
    %211 = vmatpush1.bf16.msra.mxu0 0
    %212 = vmatprep.mubr.bf16.mxu0 0
    %213 = vmatmul.mubr.bf16.gmra.mrb[0].mxu0 %v56
    %v214 = vpop.f32.mrb[0].mxu0
    %v215 = vadd.f32 0.0, %v214
    %v216 = vpop.f32.mrb[0].mxu0
    %v217 = vpop.f32.mrb[0].mxu0
    %v218 = vadd.f32 0.0, %v217
    %v219 = vpop.f32.mrb[0].mxu0
    %220 = vmatprep.mubr.bf16.mxu0 0
    %221 = vmatmul.mubr.bf16.gmra.mrb[0].mxu0 %v59
    %v222 = vpop.f32.mrb[0].mxu0
    %v223 = vadd.f32 0.0, %v222
    %v224 = vpop.f32.mrb[0].mxu0
    %v225 = vpop.f32.mrb[0].mxu0
    %v226 = vadd.f32 0.0, %v225
    %v227 = vpop.f32.mrb[0].mxu0
    %228 = vmatprep.mubr.bf16.mxu0 0
    %229 = vmatmul.mubr.bf16.gmra.mrb[0].mxu0 %v62
    %v230 = vpop.f32.mrb[0].mxu0
    %v231 = vadd.f32 0.0, %v230
    %v232 = vpop.f32.mrb[0].mxu0
    %v233 = vpop.f32.mrb[0].mxu0
    %v234 = vadd.f32 0.0, %v233
    %v235 = vpop.f32.mrb[0].mxu0
    %236 = vmatprep.mubr.bf16.mxu0 0
    %237 = vmatmul.mubr.bf16.gmra.mrb[0].mxu0 %v65
    %v238 = vpop.f32.mrb[0].mxu0
    %v239 = vadd.f32 0.0, %v238
    %v240 = vpop.f32.mrb[0].mxu0
    %v241 = vpop.f32.mrb[0].mxu0
    %v242 = vadd.f32 0.0, %v241
    %v243 = vpop.f32.mrb[0].mxu0
    %244 = vdwg.mxu0
    %v245 = vadd.f32 %v231, %v135
    %v246 = vadd.f32 %v234, %v140
    %v247 = vadd.f32 %v239, %v145
    %v248 = vadd.f32 %v242, %v150
    %249 = vrot.lane.b32.xlu0 %v215, 2
    %v250 = vpop.permute.xlu0 %249
    %251 = vrot.lane.b32.xlu0 %v218, 2
    %v252 = vpop.permute.xlu0 %251
    %253 = vrot.lane.b32.xlu0 %v223, 2
    %v254 = vpop.permute.xlu0 %253
    %255 = vrot.lane.b32.xlu0 %v226, 2
    %v256 = vpop.permute.xlu0 %255
    %v257 = vsel %vm30, %v250, 0.0
    %v258 = vsel %vm30, %v252, 0.0
    %v259 = vsel %vm30, %v254, 0.0
    %v260 = vsel %vm30, %v256, 0.0
    %v261 = vadd.f32 %v245, %v257
    %v262 = vadd.f32 %v246, %v258
    %v263 = vadd.f32 %v247, %v259
    %v264 = vadd.f32 %v248, %v260
    %s265 = scalar_lea.vmem [#allocation3], 32
    %266 = vst [vmem:[%s265] sm:$0xff] %v261
    %267 = vst [vmem:[%s265 + $0x8] sm:$0xff] %v262
    %268 = vst [vmem:[%s265 + $0x10] sm:$0xff] %v263
    %269 = vst [vmem:[%s265 + $0x18] sm:$0xff] %v264
    %s270 = scalar_lea.vmem %s0, 32
    %v271 = vld [vmem:[%s270] sm:$0xff]
    %v272 = vld [vmem:[%s270 + $0x8] sm:$0xff]
    %v273 = vpack.c.bf16 %v272, %v271
    %274 = vmatprep.subr.bf16.mxu0 0
    %275 = vmatpush1.bf16.msra.mxu0 %v273
    %276 = vmatprep.subr.bf16.mxu0 0
    %277 = vmatpush1.bf16.msra.mxu0 0
    %278 = vmatprep.subr.bf16.mxu0 0
    %279 = vmatpush1.bf16.msra.mxu0 0
    %280 = vmatprep.subr.bf16.mxu0 0
    %281 = vmatpush1.bf16.msra.mxu0 0
    %282 = vmatprep.subr.bf16.mxu0 0
    %283 = vmatpush1.bf16.msra.mxu0 0
    %284 = vmatprep.subr.bf16.mxu0 0
    %285 = vmatpush1.bf16.msra.mxu0 0
    %286 = vmatprep.subr.bf16.mxu0 0
    %287 = vmatpush1.bf16.msra.mxu0 0
    %288 = vmatprep.subr.bf16.mxu0 0
    %289 = vmatpush1.bf16.msra.mxu0 0
    %290 = vmatprep.subr.bf16.mxu0 0
    %291 = vmatpush1.bf16.msra.mxu0 0
    %292 = vmatprep.subr.bf16.mxu0 0
    %293 = vmatpush1.bf16.msra.mxu0 0
    %294 = vmatprep.subr.bf16.mxu0 0
    %295 = vmatpush1.bf16.msra.mxu0 0
    %296 = vmatprep.subr.bf16.mxu0 0
    %297 = vmatpush1.bf16.msra.mxu0 0
    %298 = vmatprep.subr.bf16.mxu0 0
    %299 = vmatpush1.bf16.msra.mxu0 0
    %300 = vmatprep.subr.bf16.mxu0 0
    %301 = vmatpush1.bf16.msra.mxu0 0
    %302 = vmatprep.subr.bf16.mxu0 0
    %303 = vmatpush1.bf16.msra.mxu0 0
    %304 = vmatprep.subr.bf16.mxu0 0
    %305 = vmatpush1.bf16.msra.mxu0 0
    %306 = vmatprep.mubr.bf16.mxu0 0
    %307 = vmatmul.mubr.bf16.gmra.mrb[0].mxu0 %v56
    %v308 = vpop.f32.mrb[0].mxu0
    %v309 = vadd.f32 0.0, %v308
    %v310 = vpop.f32.mrb[0].mxu0
    %v311 = vpop.f32.mrb[0].mxu0
    %v312 = vadd.f32 0.0, %v311
    %v313 = vpop.f32.mrb[0].mxu0
    %314 = vmatprep.mubr.bf16.mxu0 0
    %315 = vmatmul.mubr.bf16.gmra.mrb[0].mxu0 %v59
    %v316 = vpop.f32.mrb[0].mxu0
    %v317 = vadd.f32 0.0, %v316
    %v318 = vpop.f32.mrb[0].mxu0
    %v319 = vpop.f32.mrb[0].mxu0
    %v320 = vadd.f32 0.0, %v319
    %v321 = vpop.f32.mrb[0].mxu0
    %322 = vmatprep.mubr.bf16.mxu0 0
    %323 = vmatmul.mubr.bf16.gmra.mrb[0].mxu0 %v62
    %v324 = vpop.f32.mrb[0].mxu0
    %v325 = vadd.f32 0.0, %v324
    %v326 = vpop.f32.mrb[0].mxu0
    %v327 = vpop.f32.mrb[0].mxu0
    %v328 = vadd.f32 0.0, %v327
    %v329 = vpop.f32.mrb[0].mxu0
    %330 = vmatprep.mubr.bf16.mxu0 0
    %331 = vmatmul.mubr.bf16.gmra.mrb[0].mxu0 %v65
    %v332 = vpop.f32.mrb[0].mxu0
    %v333 = vadd.f32 0.0, %v332
    %v334 = vpop.f32.mrb[0].mxu0
    %v335 = vpop.f32.mrb[0].mxu0
    %v336 = vadd.f32 0.0, %v335
    %v337 = vpop.f32.mrb[0].mxu0
    %338 = vdwg.mxu0
    %v339 = vadd.f32 %v325, %v135
    %v340 = vadd.f32 %v328, %v140
    %v341 = vadd.f32 %v333, %v145
    %v342 = vadd.f32 %v336, %v150
    %343 = vrot.lane.b32.xlu0 %v309, 2
    %v344 = vpop.permute.xlu0 %343
    %345 = vrot.lane.b32.xlu0 %v312, 2
    %v346 = vpop.permute.xlu0 %345
    %347 = vrot.lane.b32.xlu0 %v317, 2
    %v348 = vpop.permute.xlu0 %347
    %349 = vrot.lane.b32.xlu0 %v320, 2
    %v350 = vpop.permute.xlu0 %349
    %v351 = vsel %vm30, %v344, 0.0
    %v352 = vsel %vm30, %v346, 0.0
    %v353 = vsel %vm30, %v348, 0.0
    %v354 = vsel %vm30, %v350, 0.0
    %v355 = vadd.f32 %v339, %v351
    %v356 = vadd.f32 %v340, %v352
    %v357 = vadd.f32 %v341, %v353
    %v358 = vadd.f32 %v342, %v354
    %s359 = scalar_lea.vmem [#allocation3], 64
    %360 = vst [vmem:[%s359] sm:$0xff] %v355
    %361 = vst [vmem:[%s359 + $0x8] sm:$0xff] %v356
    %362 = vst [vmem:[%s359 + $0x10] sm:$0xff] %v357
    %363 = vst [vmem:[%s359 + $0x18] sm:$0xff] %v358
    %s364 = scalar_lea.vmem %s0, 48
    %v365 = vld [vmem:[%s364] sm:$0xff]
    %v366 = vld [vmem:[%s364 + $0x8] sm:$0xff]
    %v367 = vpack.c.bf16 %v366, %v365
    %368 = vmatprep.subr.bf16.mxu0 0
    %369 = vmatpush1.bf16.msra.mxu0 %v367
    %370 = vmatprep.subr.bf16.mxu0 0
    %371 = vmatpush1.bf16.msra.mxu0 0
    %372 = vmatprep.subr.bf16.mxu0 0
    %373 = vmatpush1.bf16.msra.mxu0 0
    %374 = vmatprep.subr.bf16.mxu0 0
    %375 = vmatpush1.bf16.msra.mxu0 0
    %376 = vmatprep.subr.bf16.mxu0 0
    %377 = vmatpush1.bf16.msra.mxu0 0
    %378 = vmatprep.subr.bf16.mxu0 0
    %379 = vmatpush1.bf16.msra.mxu0 0
    %380 = vmatprep.subr.bf16.mxu0 0
    %381 = vmatpush1.bf16.msra.mxu0 0
    %382 = vmatprep.subr.bf16.mxu0 0
    %383 = vmatpush1.bf16.msra.mxu0 0
    %384 = vmatprep.subr.bf16.mxu0 0
    %385 = vmatpush1.bf16.msra.mxu0 0
    %386 = vmatprep.subr.bf16.mxu0 0
    %387 = vmatpush1.bf16.msra.mxu0 0
    %388 = vmatprep.subr.bf16.mxu0 0
    %389 = vmatpush1.bf16.msra.mxu0 0
    %390 = vmatprep.subr.bf16.mxu0 0
    %391 = vmatpush1.bf16.msra.mxu0 0
    %392 = vmatprep.subr.bf16.mxu0 0
    %393 = vmatpush1.bf16.msra.mxu0 0
    %394 = vmatprep.subr.bf16.mxu0 0
    %395 = vmatpush1.bf16.msra.mxu0 0
    %396 = vmatprep.subr.bf16.mxu0 0
    %397 = vmatpush1.bf16.msra.mxu0 0
    %398 = vmatprep.subr.bf16.mxu0 0
    %399 = vmatpush1.bf16.msra.mxu0 0
    %400 = vmatprep.mubr.bf16.mxu0 0
    %401 = vmatmul.mubr.bf16.gmra.mrb[0].mxu0 %v56
    %v402 = vpop.f32.mrb[0].mxu0
    %v403 = vadd.f32 0.0, %v402
    %v404 = vpop.f32.mrb[0].mxu0
    %v405 = vpop.f32.mrb[0].mxu0
    %v406 = vadd.f32 0.0, %v405
    %v407 = vpop.f32.mrb[0].mxu0
    %408 = vmatprep.mubr.bf16.mxu0 0
    %409 = vmatmul.mubr.bf16.gmra.mrb[0].mxu0 %v59
    %v410 = vpop.f32.mrb[0].mxu0
    %v411 = vadd.f32 0.0, %v410
    %v412 = vpop.f32.mrb[0].mxu0
    %v413 = vpop.f32.mrb[0].mxu0
    %v414 = vadd.f32 0.0, %v413
    %v415 = vpop.f32.mrb[0].mxu0
    %416 = vmatprep.mubr.bf16.mxu0 0
    %417 = vmatmul.mubr.bf16.gmra.mrb[0].mxu0 %v62
    %v418 = vpop.f32.mrb[0].mxu0
    %v419 = vadd.f32 0.0, %v418
    %v420 = vpop.f32.mrb[0].mxu0
    %v421 = vpop.f32.mrb[0].mxu0
    %v422 = vadd.f32 0.0, %v421
    %v423 = vpop.f32.mrb[0].mxu0
    %424 = vmatprep.mubr.bf16.mxu0 0
    %425 = vmatmul.mubr.bf16.gmra.mrb[0].mxu0 %v65
    %v426 = vpop.f32.mrb[0].mxu0
    %v427 = vadd.f32 0.0, %v426
    %v428 = vpop.f32.mrb[0].mxu0
    %v429 = vpop.f32.mrb[0].mxu0
    %v430 = vadd.f32 0.0, %v429
    %v431 = vpop.f32.mrb[0].mxu0
    %432 = vdwg.mxu0
    %v433 = vadd.f32 %v419, %v135
    %v434 = vadd.f32 %v422, %v140
    %v435 = vadd.f32 %v427, %v145
    %v436 = vadd.f32 %v430, %v150
    %437 = vrot.lane.b32.xlu0 %v403, 2
    %v438 = vpop.permute.xlu0 %437
    %439 = vrot.lane.b32.xlu0 %v406, 2
    %v440 = vpop.permute.xlu0 %439
    %441 = vrot.lane.b32.xlu0 %v411, 2
    %v442 = vpop.permute.xlu0 %441
    %443 = vrot.lane.b32.xlu0 %v414, 2
    %v444 = vpop.permute.xlu0 %443
    %v445 = vsel %vm30, %v438, 0.0
    %v446 = vsel %vm30, %v440, 0.0
    %v447 = vsel %vm30, %v442, 0.0
    %v448 = vsel %vm30, %v444, 0.0
    %v449 = vadd.f32 %v433, %v445
    %v450 = vadd.f32 %v434, %v446
    %v451 = vadd.f32 %v435, %v447
    %v452 = vadd.f32 %v436, %v448
    %s453 = scalar_lea.vmem [#allocation3], 96
    %454 = vst [vmem:[%s453] sm:$0xff] %v449
    %455 = vst [vmem:[%s453 + $0x8] sm:$0xff] %v450
    %456 = vst [vmem:[%s453 + $0x10] sm:$0xff] %v451
    %457 = vst [vmem:[%s453 + $0x18] sm:$0xff] %v452
    // Predicated region
    $region14: #{tpu_custom_call.1} parent=1 // pred_check
      _
    $region15: #{tpu_custom_call.1} parent=1 // pred_check_branch
      %459 = sbr.rel (0) target = $region17
    $region16: #{tpu_custom_call.1} parent=1 // pred_region
      %s461 = ssub.s32 2048, 2048
      %462 = vsyncadd [#allocation4], %s461
      %s463 = sshll.u32 [#allocation3], 4
      %s464 = int_to_ptr.vmem [resolvable:$true] %s463
      %469 = dma.vmem_to_hbm [thread:$0]  %s464, 2048, %s3, [#allocation4], 128, 128, 8
    $region17: #{tpu_custom_call.1} parent=1 // pred_fallthru
      _
    // Predicated region
    $region18: #{tpu_custom_call.1} parent=1 // pred_check
      _
    $region19: #{tpu_custom_call.1} parent=1 // pred_check_branch
      %471 = sbr.rel (0) target = $region21
    $region20: #{tpu_custom_call.1} parent=1 // pred_region
      %472 = dma.done [#allocation4], 2048
    $region21: #{tpu_custom_call.1} parent=1 // pred_fallthru
      _
    %473 = vsyncpa [#allocation4], 1

</llo_original>
